<compile_context>
chip_gen: v6e
topology: v6e:2x2x1
jax: 0.10.0
libtpu: 0.0.40
codegen_flags: <defaults>
</compile_context>

<pallas_src>
import jax
import jax.numpy as jnp
from jax.experimental import pallas as pl
from jax.experimental.pallas import tpu as pltpu

INPUT_SIZE = 5
OUTPUT_SIZE = 2

# Batch-columns (lane axis) per grid step.  Multiple of 128 -> lane-dense
# blocks.  (5,32768) f32 input pads to (8,32768)=1 MiB per buffer, output
# (2,32768) pads to 1 MiB; double-buffered ~4 MiB total -- far under the
# scoped-VMEM default on v5e (16 MiB), v6e (32 MiB) and v7x (32/64 MiB).
_MAX_BATCH_TILE = 32768


def _linear_kernel(x_ref, w_ref, b_ref, o_ref):
    # x_ref: (in, TB) VMEM  -- batch on the 128-lane axis
    # w_ref: (out, in) SMEM -- read as scalars (PyTorch layout, no transpose)
    # b_ref: (out,)    SMEM
    # o_ref: (out, TB) VMEM
    for j in range(OUTPUT_SIZE):              # static unroll (out == 2)
        # Unrolled scalar*vector MAC chain: pure VALU work, no XLU / MXU.
        acc = x_ref[0:1, :] * w_ref[j, 0]
        for k in range(1, INPUT_SIZE):        # static unroll (in == 5)
            acc = acc + x_ref[k:k + 1, :] * w_ref[j, k]
        # Lane-dense, unmasked full-row store.
        o_ref[j:j + 1, :] = (acc + b_ref[j]).astype(o_ref.dtype)


def linear_forward(x, weight, bias):
    """x: (B, in) f32, weight: (out, in) f32, bias: (out,) f32 -> (B, out) f32."""
    B, in_dim = x.shape
    out_dim = weight.shape[0]

    # Put batch on the lane axis; the transpose is a cheap wrapper-side layout
    # op (XLA fuses it with the producer/consumer at these sizes).
    x_t = x.T  # (in, B)

    # Whole batch when small (full-extent blocks are exempt from the (8,128)
    # rule); otherwise a lane-dense 32768-column tile.
    tb = B if B <= _MAX_BATCH_TILE else _MAX_BATCH_TILE
    grid = (pl.cdiv(B, tb),)

    out_t = pl.pallas_call(
        _linear_kernel,
        out_shape=jax.ShapeDtypeStruct((out_dim, B), x.dtype),
        grid=grid,
        in_specs=[
            pl.BlockSpec((in_dim, tb), lambda i: (0, i)),            # (in, TB) batch-tiled
            pl.BlockSpec(memory_space=pltpu.MemorySpace.SMEM),       # weight (out, in) -> scalars
            pl.BlockSpec(memory_space=pltpu.MemorySpace.SMEM),       # bias (out,) -> scalars
        ],
        out_specs=pl.BlockSpec((out_dim, tb), lambda i: (0, i)),     # (out, TB) lane-dense
        compiler_params=pltpu.CompilerParams(
            dimension_semantics=("parallel",),  # independent batch tiles
        ),
    )(x_t, weight, bias)

    return out_t.T  # back to (B, out)


if __name__ == "__main__":
    key = jax.random.PRNGKey(0)
    k_x, k_w, k_b = jax.random.split(key, 3)

    batch = 8
    x = jax.random.normal(k_x, (batch, INPUT_SIZE), dtype=jnp.float32)

    # Deterministic parameter init (PyTorch Linear shapes: W (out, in), b (out,))
    bound = 1.0 / (INPUT_SIZE ** 0.5)
    weight = jax.random.uniform(
        k_w, (OUTPUT_SIZE, INPUT_SIZE), minval=-bound, maxval=bound, dtype=jnp.float32
    )
    bias = jax.random.uniform(
        k_b, (OUTPUT_SIZE,), minval=-bound, maxval=bound, dtype=jnp.float32
    )

    out = linear_forward(x, weight, bias)
    out = jax.block_until_ready(out)

    # Reference check in plain JAX (same math as torch.nn.Linear)
    ref = x @ weight.T + bias
    assert out.shape == (batch, OUTPUT_SIZE)
    assert jnp.allclose(out, ref, atol=1e-5, rtol=1e-5)

    # Mirror the module's print of input/output sizes (host-side, like PyTorch's print).
    print("\tIn Model: input size", tuple(x.shape), "output size", tuple(out.shape))
    print("KERNEL_OK")
</pallas_src>

<mosaic_0001>
module attributes {stable_mosaic.version = 11 : i64} {
  func.func @_linear_kernel(%arg0: i32, %arg1: memref<5x8xf32, #tpu.memory_space<vmem>>, %arg2: memref<2x5xf32, #tpu.memory_space<smem>>, %arg3: memref<2xf32, #tpu.memory_space<smem>>, %arg4: memref<2x8xf32, #tpu.memory_space<vmem>>) attributes {dimension_semantics = [#tpu.dimension_semantics<parallel>], iteration_bounds = array<i64: 1>, scalar_prefetch = 0 : i64, scratch_operands = 0 : i64, tpu.core_type = #tpu.core_type<tc>, window_params = [{transform_indices = @transform_0, window_bounds = array<i64: 5, 8>}, {transform_indices = @transform_1, window_bounds = array<i64: 2, 5>}, {transform_indices = @transform_2, window_bounds = array<i64: 2>}, {transform_indices = @transform_3, window_bounds = array<i64: 2, 8>}]} {
    %c0 = arith.constant 0 : index
    %c0_0 = arith.constant 0 : index
    %0 = vector.load %arg1[%c0, %c0_0] : memref<5x8xf32, #tpu.memory_space<vmem>>, vector<1x8xf32>
    %c0_1 = arith.constant 0 : index
    %c0_2 = arith.constant 0 : index
    %1 = memref.load %arg2[%c0_1, %c0_2] : memref<2x5xf32, #tpu.memory_space<smem>>
    %2 = vector.broadcast %1 : f32 to vector<1x8xf32>
    %3 = arith.mulf %0, %2 : vector<1x8xf32>
    %c1 = arith.constant 1 : index
    %c0_3 = arith.constant 0 : index
    %4 = vector.load %arg1[%c1, %c0_3] : memref<5x8xf32, #tpu.memory_space<vmem>>, vector<1x8xf32>
    %c0_4 = arith.constant 0 : index
    %c1_5 = arith.constant 1 : index
    %5 = memref.load %arg2[%c0_4, %c1_5] : memref<2x5xf32, #tpu.memory_space<smem>>
    %6 = vector.broadcast %5 : f32 to vector<1x8xf32>
    %7 = arith.mulf %4, %6 : vector<1x8xf32>
    %8 = arith.addf %3, %7 : vector<1x8xf32>
    %c2 = arith.constant 2 : index
    %c0_6 = arith.constant 0 : index
    %9 = vector.load %arg1[%c2, %c0_6] : memref<5x8xf32, #tpu.memory_space<vmem>>, vector<1x8xf32>
    %c0_7 = arith.constant 0 : index
    %c2_8 = arith.constant 2 : index
    %10 = memref.load %arg2[%c0_7, %c2_8] : memref<2x5xf32, #tpu.memory_space<smem>>
    %11 = vector.broadcast %10 : f32 to vector<1x8xf32>
    %12 = arith.mulf %9, %11 : vector<1x8xf32>
    %13 = arith.addf %8, %12 : vector<1x8xf32>
    %c3 = arith.constant 3 : index
    %c0_9 = arith.constant 0 : index
    %14 = vector.load %arg1[%c3, %c0_9] : memref<5x8xf32, #tpu.memory_space<vmem>>, vector<1x8xf32>
    %c0_10 = arith.constant 0 : index
    %c3_11 = arith.constant 3 : index
    %15 = memref.load %arg2[%c0_10, %c3_11] : memref<2x5xf32, #tpu.memory_space<smem>>
    %16 = vector.broadcast %15 : f32 to vector<1x8xf32>
    %17 = arith.mulf %14, %16 : vector<1x8xf32>
    %18 = arith.addf %13, %17 : vector<1x8xf32>
    %c4 = arith.constant 4 : index
    %c0_12 = arith.constant 0 : index
    %19 = vector.load %arg1[%c4, %c0_12] : memref<5x8xf32, #tpu.memory_space<vmem>>, vector<1x8xf32>
    %c0_13 = arith.constant 0 : index
    %c4_14 = arith.constant 4 : index
    %20 = memref.load %arg2[%c0_13, %c4_14] : memref<2x5xf32, #tpu.memory_space<smem>>
    %21 = vector.broadcast %20 : f32 to vector<1x8xf32>
    %22 = arith.mulf %19, %21 : vector<1x8xf32>
    %23 = arith.addf %18, %22 : vector<1x8xf32>
    %c0_15 = arith.constant 0 : index
    %24 = memref.load %arg3[%c0_15] : memref<2xf32, #tpu.memory_space<smem>>
    %25 = vector.broadcast %24 : f32 to vector<1x8xf32>
    %26 = arith.addf %23, %25 : vector<1x8xf32>
    %c0_16 = arith.constant 0 : index
    %c0_17 = arith.constant 0 : index
    %27 = vector.load %arg4[%c0_16, %c0_17] : memref<2x8xf32, #tpu.memory_space<vmem>>, vector<1x8xf32>
    tpu.vector_store %arg4[%c0_16, %c0_17], %26 {strides = array<i32>} : memref<2x8xf32, #tpu.memory_space<vmem>>, vector<1x8xf32>,
    %c0_18 = arith.constant 0 : index
    %c0_19 = arith.constant 0 : index
    %28 = vector.load %arg1[%c0_18, %c0_19] : memref<5x8xf32, #tpu.memory_space<vmem>>, vector<1x8xf32>
    %c1_20 = arith.constant 1 : index
    %c0_21 = arith.constant 0 : index
    %29 = memref.load %arg2[%c1_20, %c0_21] : memref<2x5xf32, #tpu.memory_space<smem>>
    %30 = vector.broadcast %29 : f32 to vector<1x8xf32>
    %31 = arith.mulf %28, %30 : vector<1x8xf32>
    %c1_22 = arith.constant 1 : index
    %c0_23 = arith.constant 0 : index
    %32 = vector.load %arg1[%c1_22, %c0_23] : memref<5x8xf32, #tpu.memory_space<vmem>>, vector<1x8xf32>
    %c1_24 = arith.constant 1 : index
    %c1_25 = arith.constant 1 : index
    %33 = memref.load %arg2[%c1_24, %c1_25] : memref<2x5xf32, #tpu.memory_space<smem>>
    %34 = vector.broadcast %33 : f32 to vector<1x8xf32>
    %35 = arith.mulf %32, %34 : vector<1x8xf32>
    %36 = arith.addf %31, %35 : vector<1x8xf32>
    %c2_26 = arith.constant 2 : index
    %c0_27 = arith.constant 0 : index
    %37 = vector.load %arg1[%c2_26, %c0_27] : memref<5x8xf32, #tpu.memory_space<vmem>>, vector<1x8xf32>
    %c1_28 = arith.constant 1 : index
    %c2_29 = arith.constant 2 : index
    %38 = memref.load %arg2[%c1_28, %c2_29] : memref<2x5xf32, #tpu.memory_space<smem>>
    %39 = vector.broadcast %38 : f32 to vector<1x8xf32>
    %40 = arith.mulf %37, %39 : vector<1x8xf32>
    %41 = arith.addf %36, %40 : vector<1x8xf32>
    %c3_30 = arith.constant 3 : index
    %c0_31 = arith.constant 0 : index
    %42 = vector.load %arg1[%c3_30, %c0_31] : memref<5x8xf32, #tpu.memory_space<vmem>>, vector<1x8xf32>
    %c1_32 = arith.constant 1 : index
    %c3_33 = arith.constant 3 : index
    %43 = memref.load %arg2[%c1_32, %c3_33] : memref<2x5xf32, #tpu.memory_space<smem>>
    %44 = vector.broadcast %43 : f32 to vector<1x8xf32>
    %45 = arith.mulf %42, %44 : vector<1x8xf32>
    %46 = arith.addf %41, %45 : vector<1x8xf32>
    %c4_34 = arith.constant 4 : index
    %c0_35 = arith.constant 0 : index
    %47 = vector.load %arg1[%c4_34, %c0_35] : memref<5x8xf32, #tpu.memory_space<vmem>>, vector<1x8xf32>
    %c1_36 = arith.constant 1 : index
    %c4_37 = arith.constant 4 : index
    %48 = memref.load %arg2[%c1_36, %c4_37] : memref<2x5xf32, #tpu.memory_space<smem>>
    %49 = vector.broadcast %48 : f32 to vector<1x8xf32>
    %50 = arith.mulf %47, %49 : vector<1x8xf32>
    %51 = arith.addf %46, %50 : vector<1x8xf32>
    %c1_38 = arith.constant 1 : index
    %52 = memref.load %arg3[%c1_38] : memref<2xf32, #tpu.memory_space<smem>>
    %53 = vector.broadcast %52 : f32 to vector<1x8xf32>
    %54 = arith.addf %51, %53 : vector<1x8xf32>
    %c1_39 = arith.constant 1 : index
    %c0_40 = arith.constant 0 : index
    %55 = vector.load %arg4[%c1_39, %c0_40] : memref<2x8xf32, #tpu.memory_space<vmem>>, vector<1x8xf32>
    tpu.vector_store %arg4[%c1_39, %c0_40], %54 {strides = array<i32>} : memref<2x8xf32, #tpu.memory_space<vmem>>, vector<1x8xf32>,
    return
  }
  func.func @transform_0(%arg0: i32) -> (i32, i32) {
    %c0_i32 = arith.constant 0 : i32
    %c0_i32_0 = arith.constant 0 : i32
    return %c0_i32, %arg0 : i32, i32
  }
  func.func @transform_1(%arg0: i32) -> (i32, i32) {
    %c0_i32 = arith.constant 0 : i32
    %c0_i32_0 = arith.constant 0 : i32
    %c0_i32_1 = arith.constant 0 : i32
    return %c0_i32, %c0_i32_0 : i32, i32
  }
  func.func @transform_2(%arg0: i32) -> i32 {
    %c0_i32 = arith.constant 0 : i32
    %c0_i32_0 = arith.constant 0 : i32
    return %c0_i32 : i32
  }
  func.func @transform_3(%arg0: i32) -> (i32, i32) {
    %c0_i32 = arith.constant 0 : i32
    %c0_i32_0 = arith.constant 0 : i32
    return %c0_i32, %arg0 : i32, i32
  }
}

</mosaic_0001>

<llo_original>
// kernel: tpu_custom_call.1
$region0: #{tpu_custom_call.1}
  #allocation0 [shape = 'u32[]', space=smem, size = 0x4, offset = 0x4, fixed_abs, tag = 'smem constant byte address 0x4 - core index']
  #allocation1 [shape = 'u32[144,128]{1,0:T(1,128)}', space=vmem, size = 0x12000, scoped, tag = 'internal scratch']
  %s0 = inlined_call_operand.hbm [shape: f32[5,8], index: 0, kind: input, shape index: {}]
  %s1 = inlined_call_operand.hbm [shape: f32[2,5], index: 1, kind: input, shape index: {}]
  %s2 = inlined_call_operand.vmem [shape: f32[2], index: 2, kind: input, shape index: {}]
  %s3 = inlined_call_operand.hbm [shape: f32[2,8], index: 3, kind: output, shape index: {}]
  %s4 = sld [smem:[#allocation0]]
  $region34: #{tpu_custom_call.1} parent=0
    _
  %s6 = ssub.s32 1, %s4
  %s7 = scalar_select 0, %s6, %s4
  $region1: #{tpu_custom_call.1} parent=0
    #allocation2 [shape = 'u8[4096]{0}', space=vmem, size = 0x1000, scoped, tag = 'input window, operand 0, single buffered']
    #allocation3 [shape = 's32[1]{0}', space=sflag, size = 0x4, scoped, tag = 'scoped memory for tpu_custom_call.1']
    #allocation4 [shape = 's32[1]{0}', space=sflag, size = 0x4, scoped, tag = 'scoped memory for tpu_custom_call.1']
    #allocation5 [shape = 's32[1]{0}', space=sflag, size = 0x4, scoped, tag = 'scoped memory for tpu_custom_call.1']
    #allocation6 [shape = 's32[1]{0}', space=sflag, size = 0x4, scoped, tag = 'scoped memory for tpu_custom_call.1']
    #allocation7 [shape = 'u8[1024]{0}', space=smem, size = 0x400, scoped, tag = 'input window, operand 1, single buffered']
    #allocation8 [shape = 'u8[512]{0}', space=smem, size = 0x200, scoped, tag = 'input window, operand 2, single buffered']
    #allocation9 [shape = 'u8[1024]{0}', space=vmem, size = 0x400, scoped, tag = 'output window, operand 0, single buffered']
    %8 = vsyncpa [#allocation3], 0
    %9 = vsyncpa [#allocation5], 0
    %10 = vsyncpa [#allocation6], 0
    %11 = vsyncpa [#allocation4], 0
    // Predicated region
    $region2: #{tpu_custom_call.1} parent=1 // pred_check
      _
    $region3: #{tpu_custom_call.1} parent=1 // pred_check_branch
      %13 = sbr.rel (0) target = $region5
    $region4: #{tpu_custom_call.1} parent=1 // pred_region
      %s15 = ssub.s32 128, 128
      %16 = vsyncadd [#allocation3], %s15
      %s18 = sshll.u32 [#allocation2], 4
      %s19 = int_to_ptr.vmem [resolvable:$true] %s18
      %21 = dma.hbm_to_vmem [thread:$0]  %s0, 128, %s19, [#allocation3]
    $region5: #{tpu_custom_call.1} parent=1 // pred_fallthru
      _
    // Predicated region
    $region6: #{tpu_custom_call.1} parent=1 // pred_check
      _
    $region7: #{tpu_custom_call.1} parent=1 // pred_check_branch
      %23 = sbr.rel (0) target = $region9
    $region8: #{tpu_custom_call.1} parent=1 // pred_region
      %s25 = ssub.s32 32, 32
      %26 = vsyncadd [#allocation5], %s25
      %29 = dma.hbm_to_smem %s1, 32, [#allocation7], [#allocation5]
    $region9: #{tpu_custom_call.1} parent=1 // pred_fallthru
      _
    // Predicated region
    $region10: #{tpu_custom_call.1} parent=1 // pred_check
      _
    $region11: #{tpu_custom_call.1} parent=1 // pred_check_branch
      %31 = sbr.rel (0) target = $region13
    $region12: #{tpu_custom_call.1} parent=1 // pred_region
      %s33 = ssub.s32 16, 16
      %34 = vsyncadd [#allocation6], %s33
      %s36 = sshll.u32 %s2, 4
      %s37 = int_to_ptr.vmem [resolvable:$true] %s36
      %39 = dma.vmem_to_smem %s37, 16, [#allocation8], [#allocation6]
    $region13: #{tpu_custom_call.1} parent=1 // pred_fallthru
      _
    // Predicated region
    $region14: #{tpu_custom_call.1} parent=1 // pred_check
      _
    $region15: #{tpu_custom_call.1} parent=1 // pred_check_branch
      %41 = sbr.rel (0) target = $region17
    $region16: #{tpu_custom_call.1} parent=1 // pred_region
      %42 = dma.done [#allocation3], 128
    $region17: #{tpu_custom_call.1} parent=1 // pred_fallthru
      _
    // Predicated region
    $region18: #{tpu_custom_call.1} parent=1 // pred_check
      _
    $region19: #{tpu_custom_call.1} parent=1 // pred_check_branch
      %44 = sbr.rel (0) target = $region21
    $region20: #{tpu_custom_call.1} parent=1 // pred_region
      %45 = dma.done [#allocation5], 32
    $region21: #{tpu_custom_call.1} parent=1 // pred_fallthru
      _
    // Predicated region
    $region22: #{tpu_custom_call.1} parent=1 // pred_check
      _
    $region23: #{tpu_custom_call.1} parent=1 // pred_check_branch
      %47 = sbr.rel (0) target = $region25
    $region24: #{tpu_custom_call.1} parent=1 // pred_region
      %48 = dma.done [#allocation6], 16
    $region25: #{tpu_custom_call.1} parent=1 // pred_fallthru
      _
    %49 = sfence
    %v50 = vld [vmem:[#allocation2] sm:$0x1]
    %s51 = sld [smem:[#allocation7]]
    %v52 = vstv %s51
    %v53 = vmul.f32 %v50, %v52
    %v54 = vld [vmem:[#allocation2 + $0x1] sm:$0x1]
    %s55 = sld [smem:[#allocation7 + $0x1]]
    %v56 = vstv %s55
    %v57 = vmul.f32 %v54, %v56
    %v58 = vadd.f32 %v53, %v57
    %v59 = vld [vmem:[#allocation2 + $0x2] sm:$0x1]
    %s60 = sld [smem:[#allocation7 + $0x2]]
    %v61 = vstv %s60
    %v62 = vmul.f32 %v59, %v61
    %v63 = vadd.f32 %v58, %v62
    %v64 = vld [vmem:[#allocation2 + $0x3] sm:$0x1]
    %s65 = sld [smem:[#allocation7 + $0x3]]
    %v66 = vstv %s65
    %v67 = vmul.f32 %v64, %v66
    %v68 = vadd.f32 %v63, %v67
    %v69 = vld [vmem:[#allocation2 + $0x4] sm:$0x1]
    %s70 = sld [smem:[#allocation7 + $0x4]]
    %v71 = vstv %s70
    %v72 = vmul.f32 %v69, %v71
    %v73 = vadd.f32 %v68, %v72
    %s74 = sld [smem:[#allocation8]]
    %v75 = vstv %s74
    %v76 = vadd.f32 %v73, %v75
    %vm77 = vcmask 57344
    %78 = vst.msk [vmem:[#allocation9] sm:$0x1] %vm77, %v76
    %v79 = vld [vmem:[#allocation2] sm:$0x1]
    %s80 = sld [smem:[#allocation7 + $0x80]]
    %v81 = vstv %s80
    %v82 = vmul.f32 %v79, %v81
    %v83 = vld [vmem:[#allocation2 + $0x1] sm:$0x1]
    %s84 = sld [smem:[#allocation7 + $0x81]]
    %v85 = vstv %s84
    %v86 = vmul.f32 %v83, %v85
    %v87 = vadd.f32 %v82, %v86
    %v88 = vld [vmem:[#allocation2 + $0x2] sm:$0x1]
    %s89 = sld [smem:[#allocation7 + $0x82]]
    %v90 = vstv %s89
    %v91 = vmul.f32 %v88, %v90
    %v92 = vadd.f32 %v87, %v91
    %v93 = vld [vmem:[#allocation2 + $0x3] sm:$0x1]
    %s94 = sld [smem:[#allocation7 + $0x83]]
    %v95 = vstv %s94
    %v96 = vmul.f32 %v93, %v95
    %v97 = vadd.f32 %v92, %v96
    %v98 = vld [vmem:[#allocation2 + $0x4] sm:$0x1]
    %s99 = sld [smem:[#allocation7 + $0x84]]
    %v100 = vstv %s99
    %v101 = vmul.f32 %v98, %v100
    %v102 = vadd.f32 %v97, %v101
    %s103 = sld [smem:[#allocation8 + $0x1]]
    %v104 = vstv %s103
    %v105 = vadd.f32 %v102, %v104
    %106 = vst.msk [vmem:[#allocation9 + $0x1] sm:$0x1] %vm77, %v105
    // Predicated region
    $region26: #{tpu_custom_call.1} parent=1 // pred_check
      _
    $region27: #{tpu_custom_call.1} parent=1 // pred_check_branch
      %108 = sbr.rel (0) target = $region29
    $region28: #{tpu_custom_call.1} parent=1 // pred_region
      %s110 = ssub.s32 32, 32
      %111 = vsyncadd [#allocation4], %s110
      %s113 = sshll.u32 [#allocation9], 4
      %s114 = int_to_ptr.vmem [resolvable:$true] %s113
      %116 = dma.vmem_to_hbm [thread:$0]  %s114, 32, %s3, [#allocation4]
    $region29: #{tpu_custom_call.1} parent=1 // pred_fallthru
      _
    // Predicated region
    $region30: #{tpu_custom_call.1} parent=1 // pred_check
      _
    $region31: #{tpu_custom_call.1} parent=1 // pred_check_branch
      %118 = sbr.rel (0) target = $region33
    $region32: #{tpu_custom_call.1} parent=1 // pred_region
      %119 = dma.done [#allocation4], 32
    $region33: #{tpu_custom_call.1} parent=1 // pred_fallthru
      _
    %120 = vsyncpa [#allocation3], 1
    %121 = vsyncpa [#allocation4], 1
    %122 = vsyncpa [#allocation5], 1
    %123 = vsyncpa [#allocation6], 1

</llo_original>
